<compile_context>
chip_gen: v7x
topology: tpu7x:2x2x1
jax: 0.10.0
libtpu: 0.0.40
codegen_flags: <defaults>
</compile_context>

<pallas_src>
import functools

import jax
import jax.numpy as jnp
from jax import lax
from jax.experimental import pallas as pl
from jax.experimental.pallas import tpu as pltpu


def _mha_kernel(x_ref, wqkv_ref, bqkv_ref, o_ref, *, seq_len, batch_per_block):
    E = x_ref.shape[-1]
    scale = 1.0 / (float(E) ** 0.5)           # module scales by embed_dim ** 0.5

    # Fused QKV projection for the whole batch block:
    #   (bb*S, E) @ (E, 3E) -> (bb*S, 3E), bf16 MXU inputs, f32 accumulation,
    # then ONE broadcast add of the concatenated (1, 3E) bias.
    x_bf16 = x_ref[...].astype(jnp.bfloat16)
    qkv = jnp.dot(x_bf16, wqkv_ref[...], preferred_element_type=jnp.float32)
    qkv = qkv + bqkv_ref[...]                 # single (1, 3E) broadcast add

    for b in range(batch_per_block):          # tiny static unroll over batch
        rows = slice(b * seq_len, (b + 1) * seq_len)     # sublane-aligned
        q = qkv[rows, 0 * E:1 * E].astype(jnp.bfloat16)
        k = qkv[rows, 1 * E:2 * E].astype(jnp.bfloat16)
        v = qkv[rows, 2 * E:3 * E].astype(jnp.bfloat16)

        # Q @ K^T by contracting the last dims directly (no explicit k.T).
        s = lax.dot_general(q, k, (((1,), (1,)), ((), ())),
                            preferred_element_type=jnp.float32) * scale

        # Numerically-stable softmax, kept in f32.
        s = s - jnp.max(s, axis=-1, keepdims=True)
        p = jnp.exp(s)
        p = p * pl.reciprocal(jnp.sum(p, axis=-1, keepdims=True), approx=True)

        out = jnp.dot(p.astype(jnp.bfloat16), v,
                      preferred_element_type=jnp.float32)          # (S, E)
        o_ref[rows, :] = out.astype(o_ref.dtype)


def _batch_blocks(batch):
    """2-way batch split on v7x (2 TensorCores/chip); single block elsewhere."""
    try:
        kind = jax.devices()[0].device_kind.lower()
        two_tc = ("v7" in kind) or ("tpu7" in kind)
    except Exception:
        two_tc = False
    return 2 if (two_tc and batch >= 2 and batch % 2 == 0) else 1


def refactored_mha_forward(query, wq, bq, wk, bk, wv, bv):
    """query: (B, S, E) f32.  w*: (E, E) pre-transposed for x @ W.  b*: (1, E)."""
    B, S, E = query.shape

    # Fuse the three projections: one (E, 3E) weight, one (1, 3E) bias.
    w_qkv = jnp.concatenate([wq, wk, wv], axis=1).astype(jnp.bfloat16)
    b_qkv = jnp.concatenate([bq, bk, bv], axis=1).astype(jnp.float32)

    # Flatten batch into rows so the fused projection runs as one matmul with
    # M = (B/n_blocks)*S and the grid has at most 2 steps.
    x2d = query.reshape(B * S, E)

    n_blocks = _batch_blocks(B)
    bb = B // n_blocks
    rows_per_block = bb * S

    kernel = functools.partial(_mha_kernel, seq_len=S, batch_per_block=bb)

    grid_spec = pltpu.PrefetchScalarGridSpec(
        num_scalar_prefetch=0,
        grid=(n_blocks,),
        in_specs=[
            pl.BlockSpec((rows_per_block, E), lambda i: (i, 0)),   # x rows
            pl.BlockSpec((E, 3 * E), lambda i: (0, 0)),            # fused W_qkv
            pl.BlockSpec((1, 3 * E), lambda i: (0, 0)),            # fused b_qkv
        ],
        out_specs=pl.BlockSpec((rows_per_block, E), lambda i: (i, 0)),
    )

    out = pl.pallas_call(
        kernel,
        out_shape=jax.ShapeDtypeStruct((B * S, E), query.dtype),
        grid_spec=grid_spec,
        compiler_params=pltpu.CompilerParams(
            dimension_semantics=("parallel",)),
    )(x2d, w_qkv, b_qkv)

    return out.reshape(B, S, E)


def _reference(query, wq, bq, wk, bk, wv, bv):
    E = query.shape[-1]
    q = query @ wq + bq
    k = query @ wk + bk
    v = query @ wv + bv
    s = jnp.einsum("bqe,bke->bqk", q, k) / (E ** 0.5)
    p = jax.nn.softmax(s, axis=-1)
    return jnp.einsum("bqk,bke->bqe", p, v)


if __name__ == "__main__":
    batch, seq_len, embed_dim = 2, 8, 32
    num_heads = 4  # present in __init__ but unused by the forward math

    key = jax.random.PRNGKey(0)
    kq, kw1, kw2, kw3, kb1, kb2, kb3 = jax.random.split(key, 7)

    query = jax.random.normal(kq, (batch, seq_len, embed_dim), dtype=jnp.float32)

    # Deterministic "Linear" parameters (stored as (in, out) for x @ W + b).
    scale = 1.0 / (embed_dim ** 0.5)
    wq = jax.random.uniform(kw1, (embed_dim, embed_dim), jnp.float32, -scale, scale)
    wk = jax.random.uniform(kw2, (embed_dim, embed_dim), jnp.float32, -scale, scale)
    wv = jax.random.uniform(kw3, (embed_dim, embed_dim), jnp.float32, -scale, scale)
    bq = jax.random.uniform(kb1, (1, embed_dim), jnp.float32, -scale, scale)
    bk = jax.random.uniform(kb2, (1, embed_dim), jnp.float32, -scale, scale)
    bv = jax.random.uniform(kb3, (1, embed_dim), jnp.float32, -scale, scale)

    out = refactored_mha_forward(query, wq, bq, wk, bk, wv, bv)
    out = jax.block_until_ready(out)

    ref = _reference(query, wq, bq, wk, bk, wv, bv)
    assert out.shape == (batch, seq_len, embed_dim)
    # bf16 MXU inputs (f32 accumulation) vs. a pure-f32 reference -> relaxed tol.
    assert jnp.allclose(out, ref, atol=2e-2, rtol=2e-2), float(
        jnp.max(jnp.abs(out - ref)))

    print("KERNEL_OK")
</pallas_src>

<mosaic_0001>
module attributes {stable_mosaic.version = 11 : i64} {
  func.func @_mha_kernel(%arg0: i32, %arg1: memref<16x32xf32, #tpu.memory_space<vmem>>, %arg2: memref<32x96xbf16, #tpu.memory_space<vmem>>, %arg3: memref<1x96xf32, #tpu.memory_space<vmem>>, %arg4: memref<16x32xf32, #tpu.memory_space<vmem>>) attributes {dimension_semantics = [#tpu.dimension_semantics<parallel>], iteration_bounds = array<i64: 1>, scalar_prefetch = 0 : i64, scratch_operands = 0 : i64, tpu.core_type = #tpu.core_type<tc>, window_params = [{transform_indices = @transform_0, window_bounds = array<i64: 16, 32>}, {pipeline_mode = #tpu.pipeline_mode<synchronous>, transform_indices = @transform_1, window_bounds = array<i64: 32, 96>}, {pipeline_mode = #tpu.pipeline_mode<synchronous>, transform_indices = @transform_2, window_bounds = array<i64: 1, 96>}, {transform_indices = @transform_3, window_bounds = array<i64: 16, 32>}]} {
    %c0 = arith.constant 0 : index
    %c0_0 = arith.constant 0 : index
    %0 = vector.load %arg1[%c0, %c0_0] : memref<16x32xf32, #tpu.memory_space<vmem>>, vector<16x32xf32>
    %1 = arith.truncf %0 : vector<16x32xf32> to vector<16x32xbf16>
    %c0_1 = arith.constant 0 : index
    %c0_2 = arith.constant 0 : index
    %2 = vector.load %arg2[%c0_1, %c0_2] : memref<32x96xbf16, #tpu.memory_space<vmem>>, vector<32x96xbf16>
    %cst = arith.constant dense<0.000000e+00> : vector<16x96xf32>
    %3 = tpu.matmul %1, %2, %cst {dimension_numbers = #tpu.dot_dimension_numbers<[1], [0], [0], [1], [0, 0, 1, 1], [], []>} : vector<16x32xbf16>, vector<32x96xbf16>, vector<16x96xf32> -> vector<16x96xf32>
    %c0_3 = arith.constant 0 : index
    %c0_4 = arith.constant 0 : index
    %4 = vector.load %arg3[%c0_3, %c0_4] : memref<1x96xf32, #tpu.memory_space<vmem>>, vector<1x96xf32>
    %5 = vector.broadcast %4 : vector<1x96xf32> to vector<16x96xf32>
    %6 = arith.addf %3, %5 : vector<16x96xf32>
    %7 = vector.extract_strided_slice %6 {offsets = [0, 0], sizes = [8, 32], strides = [1, 1]} : vector<16x96xf32> to vector<8x32xf32>
    %8 = arith.truncf %7 : vector<8x32xf32> to vector<8x32xbf16>
    %9 = vector.extract_strided_slice %6 {offsets = [0, 32], sizes = [8, 32], strides = [1, 1]} : vector<16x96xf32> to vector<8x32xf32>
    %10 = arith.truncf %9 : vector<8x32xf32> to vector<8x32xbf16>
    %11 = vector.extract_strided_slice %6 {offsets = [0, 64], sizes = [8, 32], strides = [1, 1]} : vector<16x96xf32> to vector<8x32xf32>
    %12 = arith.truncf %11 : vector<8x32xf32> to vector<8x32xbf16>
    %cst_5 = arith.constant dense<0.000000e+00> : vector<8x8xf32>
    %13 = tpu.matmul %8, %10, %cst_5 {dimension_numbers = #tpu.dot_dimension_numbers<[1], [1], [0], [0], [0, 0, 1, 0], [], []>} : vector<8x32xbf16>, vector<8x32xbf16>, vector<8x8xf32> -> vector<8x8xf32>
    %cst_6 = arith.constant 0.176776692 : f32
    %14 = vector.broadcast %cst_6 : f32 to vector<8x8xf32>
    %15 = arith.mulf %13, %14 : vector<8x8xf32>
    %cst_7 = arith.constant dense<0xFF800000> : vector<8xf32>
    %16 = vector.multi_reduction <maximumf>, %15, %cst_7 [1] : vector<8x8xf32> to vector<8xf32>
    %17 = vector.shape_cast %16 : vector<8xf32> to vector<8x1xf32>
    %18 = vector.broadcast %17 : vector<8x1xf32> to vector<8x8xf32>
    %19 = arith.subf %15, %18 : vector<8x8xf32>
    %20 = math.exp %19 : vector<8x8xf32>
    %cst_8 = arith.constant dense<0.000000e+00> : vector<8xf32>
    %21 = vector.multi_reduction <add>, %20, %cst_8 [1] : vector<8x8xf32> to vector<8xf32>
    %22 = vector.shape_cast %21 : vector<8xf32> to vector<8x1xf32>
    %23 = tpu.reciprocal %22 {approx = true} : vector<8x1xf32> -> vector<8x1xf32>
    %24 = vector.broadcast %23 : vector<8x1xf32> to vector<8x8xf32>
    %25 = arith.mulf %20, %24 : vector<8x8xf32>
    %26 = arith.truncf %25 : vector<8x8xf32> to vector<8x8xbf16>
    %cst_9 = arith.constant dense<0.000000e+00> : vector<8x32xf32>
    %27 = tpu.matmul %26, %12, %cst_9 {dimension_numbers = #tpu.dot_dimension_numbers<[1], [0], [0], [1], [0, 0, 1, 1], [], []>} : vector<8x8xbf16>, vector<8x32xbf16>, vector<8x32xf32> -> vector<8x32xf32>
    %c0_10 = arith.constant 0 : index
    %c0_11 = arith.constant 0 : index
    %28 = vector.load %arg4[%c0_10, %c0_11] : memref<16x32xf32, #tpu.memory_space<vmem>>, vector<8x32xf32>
    tpu.vector_store %arg4[%c0_10, %c0_11], %27 {strides = array<i32>} : memref<16x32xf32, #tpu.memory_space<vmem>>, vector<8x32xf32>,
    %29 = vector.extract_strided_slice %6 {offsets = [8, 0], sizes = [8, 32], strides = [1, 1]} : vector<16x96xf32> to vector<8x32xf32>
    %30 = arith.truncf %29 : vector<8x32xf32> to vector<8x32xbf16>
    %31 = vector.extract_strided_slice %6 {offsets = [8, 32], sizes = [8, 32], strides = [1, 1]} : vector<16x96xf32> to vector<8x32xf32>
    %32 = arith.truncf %31 : vector<8x32xf32> to vector<8x32xbf16>
    %33 = vector.extract_strided_slice %6 {offsets = [8, 64], sizes = [8, 32], strides = [1, 1]} : vector<16x96xf32> to vector<8x32xf32>
    %34 = arith.truncf %33 : vector<8x32xf32> to vector<8x32xbf16>
    %cst_12 = arith.constant dense<0.000000e+00> : vector<8x8xf32>
    %35 = tpu.matmul %30, %32, %cst_12 {dimension_numbers = #tpu.dot_dimension_numbers<[1], [1], [0], [0], [0, 0, 1, 0], [], []>} : vector<8x32xbf16>, vector<8x32xbf16>, vector<8x8xf32> -> vector<8x8xf32>
    %cst_13 = arith.constant 0.176776692 : f32
    %36 = vector.broadcast %cst_13 : f32 to vector<8x8xf32>
    %37 = arith.mulf %35, %36 : vector<8x8xf32>
    %cst_14 = arith.constant dense<0xFF800000> : vector<8xf32>
    %38 = vector.multi_reduction <maximumf>, %37, %cst_14 [1] : vector<8x8xf32> to vector<8xf32>
    %39 = vector.shape_cast %38 : vector<8xf32> to vector<8x1xf32>
    %40 = vector.broadcast %39 : vector<8x1xf32> to vector<8x8xf32>
    %41 = arith.subf %37, %40 : vector<8x8xf32>
    %42 = math.exp %41 : vector<8x8xf32>
    %cst_15 = arith.constant dense<0.000000e+00> : vector<8xf32>
    %43 = vector.multi_reduction <add>, %42, %cst_15 [1] : vector<8x8xf32> to vector<8xf32>
    %44 = vector.shape_cast %43 : vector<8xf32> to vector<8x1xf32>
    %45 = tpu.reciprocal %44 {approx = true} : vector<8x1xf32> -> vector<8x1xf32>
    %46 = vector.broadcast %45 : vector<8x1xf32> to vector<8x8xf32>
    %47 = arith.mulf %42, %46 : vector<8x8xf32>
    %48 = arith.truncf %47 : vector<8x8xf32> to vector<8x8xbf16>
    %cst_16 = arith.constant dense<0.000000e+00> : vector<8x32xf32>
    %49 = tpu.matmul %48, %34, %cst_16 {dimension_numbers = #tpu.dot_dimension_numbers<[1], [0], [0], [1], [0, 0, 1, 1], [], []>} : vector<8x8xbf16>, vector<8x32xbf16>, vector<8x32xf32> -> vector<8x32xf32>
    %c8 = arith.constant 8 : index
    %c0_17 = arith.constant 0 : index
    %50 = vector.load %arg4[%c8, %c0_17] : memref<16x32xf32, #tpu.memory_space<vmem>>, vector<8x32xf32>
    tpu.vector_store %arg4[%c8, %c0_17], %49 {strides = array<i32>} : memref<16x32xf32, #tpu.memory_space<vmem>>, vector<8x32xf32>,
    return
  }
  func.func @transform_0(%arg0: i32) -> (i32, i32) {
    %c0_i32 = arith.constant 0 : i32
    %c0_i32_0 = arith.constant 0 : i32
    return %arg0, %c0_i32 : i32, i32
  }
  func.func @transform_1(%arg0: i32) -> (i32, i32) {
    %c0_i32 = arith.constant 0 : i32
    %c0_i32_0 = arith.constant 0 : i32
    %c0_i32_1 = arith.constant 0 : i32
    return %c0_i32, %c0_i32_0 : i32, i32
  }
  func.func @transform_2(%arg0: i32) -> (i32, i32) {
    %c0_i32 = arith.constant 0 : i32
    %c0_i32_0 = arith.constant 0 : i32
    %c0_i32_1 = arith.constant 0 : i32
    return %c0_i32, %c0_i32_0 : i32, i32
  }
  func.func @transform_3(%arg0: i32) -> (i32, i32) {
    %c0_i32 = arith.constant 0 : i32
    %c0_i32_0 = arith.constant 0 : i32
    return %arg0, %c0_i32 : i32, i32
  }
}

</mosaic_0001>

<llo_original>
// kernel: tpu_custom_call.1
$region0: #{tpu_custom_call.1}
  #allocation0 [shape = 'u32[]', space=smem, size = 0x4, offset = 0x4, fixed_abs, tag = 'smem constant byte address 0x4 - core index']
  #allocation1 [shape = 'u32[144,128]{1,0:T(1,128)}', space=vmem, size = 0x12000, scoped, tag = 'internal scratch']
  %s0 = inlined_call_operand.hbm [shape: f32[16,32], index: 0, kind: input, shape index: {}]
  %s1 = inlined_call_operand.hbm [shape: bf16[32,96], index: 1, kind: input, shape index: {}]
  %s2 = inlined_call_operand.vmem [shape: f32[1,96], index: 2, kind: input, shape index: {}]
  %s3 = inlined_call_operand.hbm [shape: f32[16,32], index: 3, kind: output, shape index: {}]
  %s4 = sld [smem:[#allocation0]]
  $region30: #{tpu_custom_call.1} parent=0
    _
  %s6 = ssub.s32 1, %s4
  %s7 = scalar_select 0, %s6, %s4
  $region1: #{tpu_custom_call.1} parent=0
    #allocation2 [shape = 'u8[8192]{0}', space=vmem, size = 0x2000, scoped, tag = 'input window, operand 0, single buffered']
    #allocation3 [shape = 's32[1]{0}', space=sflag, size = 0x4, scoped, tag = 'scoped memory for tpu_custom_call.1']
    #allocation4 [shape = 's32[1]{0}', space=sflag, size = 0x4, scoped, tag = 'scoped memory for tpu_custom_call.1']
    #allocation5 [shape = 'u8[8192]{0}', space=vmem, size = 0x2000, scoped, tag = 'input window, operand 1, single buffered']
    #allocation6 [shape = 's32[1]{0}', space=sflag, size = 0x4, scoped, tag = 'scoped memory for tpu_custom_call.1']
    #allocation7 [shape = 'u8[8192]{0}', space=vmem, size = 0x2000, scoped, tag = 'output window, operand 0, single buffered']
    %8 = vsyncpa [#allocation3], 0
    %9 = vsyncpa [#allocation6], 0
    %10 = vsyncpa [#allocation4], 0
    // Predicated region
    $region2: #{tpu_custom_call.1} parent=1 // pred_check
      _
    $region3: #{tpu_custom_call.1} parent=1 // pred_check_branch
      %12 = sbr.rel (0) target = $region5
    $region4: #{tpu_custom_call.1} parent=1 // pred_region
      %s14 = ssub.s32 256, 256
      %15 = vsyncadd [#allocation3], %s14
      %s16 = sshll.u32 [#allocation2], 4
      %s17 = int_to_ptr.vmem [resolvable:$true] %s16
      %22 = dma.hbm_to_vmem [thread:$0]  %s0, 256, %s17, [#allocation3], 128, 128, 8
    $region5: #{tpu_custom_call.1} parent=1 // pred_fallthru
      _
    // Predicated region
    $region6: #{tpu_custom_call.1} parent=1 // pred_check
      _
    $region7: #{tpu_custom_call.1} parent=1 // pred_check_branch
      %24 = sbr.rel (0) target = $region9
    $region8: #{tpu_custom_call.1} parent=1 // pred_region
      %s26 = ssub.s32 256, 256
      %27 = vsyncadd [#allocation6], %s26
      %s28 = sshll.u32 [#allocation5], 4
      %s29 = int_to_ptr.vmem [resolvable:$true] %s28
      %34 = dma.hbm_to_vmem [thread:$0]  %s1, 256, %s29, [#allocation6], 64, 64, 4
    $region9: #{tpu_custom_call.1} parent=1 // pred_fallthru
      _
    // Predicated region
    $region10: #{tpu_custom_call.1} parent=1 // pred_check
      _
    $region11: #{tpu_custom_call.1} parent=1 // pred_check_branch
      %36 = sbr.rel (0) target = $region13
    $region12: #{tpu_custom_call.1} parent=1 // pred_region
      _
    $region13: #{tpu_custom_call.1} parent=1 // pred_fallthru
      _
    // Predicated region
    $region14: #{tpu_custom_call.1} parent=1 // pred_check
      _
    $region15: #{tpu_custom_call.1} parent=1 // pred_check_branch
      %38 = sbr.rel (0) target = $region17
    $region16: #{tpu_custom_call.1} parent=1 // pred_region
      %39 = dma.done [#allocation3], 256
    $region17: #{tpu_custom_call.1} parent=1 // pred_fallthru
      _
    // Predicated region
    $region18: #{tpu_custom_call.1} parent=1 // pred_check
      _
    $region19: #{tpu_custom_call.1} parent=1 // pred_check_branch
      %41 = sbr.rel (0) target = $region21
    $region20: #{tpu_custom_call.1} parent=1 // pred_region
      %42 = dma.done [#allocation6], 256
    $region21: #{tpu_custom_call.1} parent=1 // pred_fallthru
      _
    %v44 = vld [vmem:[#allocation2] sm:$0xff]
    %v45 = vld [vmem:[#allocation2 + $0x8] sm:$0xff]
    %v46 = vpack.c.bf16 %v45, %v44
    %v47 = vld [vmem:[#allocation5] sm:$0xf]
    %v48 = vld [vmem:[#allocation5 + $0x4] sm:$0xf]
    %v49 = vld [vmem:[#allocation5 + $0x8] sm:$0xf]
    %v50 = vld [vmem:[#allocation5 + $0xc] sm:$0xf]
    %v51 = vld [vmem:[%s2] sm:$0x1]
    %v53 = vlaneseq
    %v54 = vshrl.u32 %v53, 7
    %v55 = vsub.s32 0, %v54
    %v56 = vrot.slane %v51, %v55
    %v62 = vunpack.c.l.b16 %v47
    %v63 = vunpack.c.l.b16 %v48
    %v64 = vunpack.c.l.b16 %v49
    %v65 = vunpack.c.l.b16 %v50
    %v66 = vpack.c.b16 %v63, %v62
    %v67 = vpack.c.b16 %v65, %v64
    %vm70 = vcmask 261120
    %v72 = vsel %vm70, %v46, 0
    %74 = vmatprep.subr.bf16.mxu0 0
    %75 = vmatpush1.bf16.msra.mxu0 %v66
    %76 = vmatprep.subr.bf16.mxu0 0
    %77 = vmatpush1.bf16.msra.mxu0 %v67
    %78 = vmatprep.subr.bf16.mxu0 0
    %79 = vmatpush1.bf16.msra.mxu0 0
    %80 = vmatprep.subr.bf16.mxu0 0
    %81 = vmatpush1.bf16.msra.mxu0 0
    %82 = vmatprep.subr.bf16.mxu0 0
    %83 = vmatpush1.bf16.msra.mxu0 0
    %84 = vmatprep.subr.bf16.mxu0 0
    %85 = vmatpush1.bf16.msra.mxu0 0
    %86 = vmatprep.subr.bf16.mxu0 0
    %87 = vmatpush1.bf16.msra.mxu0 0
    %88 = vmatprep.subr.bf16.mxu0 0
    %89 = vmatpush1.bf16.msra.mxu0 0
    %90 = vmatprep.subr.bf16.mxu0 0
    %91 = vmatpush1.bf16.msra.mxu0 0
    %92 = vmatprep.subr.bf16.mxu0 0
    %93 = vmatpush1.bf16.msra.mxu0 0
    %94 = vmatprep.subr.bf16.mxu0 0
    %95 = vmatpush1.bf16.msra.mxu0 0
    %96 = vmatprep.subr.bf16.mxu0 0
    %97 = vmatpush1.bf16.msra.mxu0 0
    %98 = vmatprep.subr.bf16.mxu0 0
    %99 = vmatpush1.bf16.msra.mxu0 0
    %100 = vmatprep.subr.bf16.mxu0 0
    %101 = vmatpush1.bf16.msra.mxu0 0
    %102 = vmatprep.subr.bf16.mxu0 0
    %103 = vmatpush1.bf16.msra.mxu0 0
    %104 = vmatprep.subr.bf16.mxu0 0
    %105 = vmatpush1.bf16.msra.mxu0 0
    %106 = vmatprep.mubr.bf16.mxu0 0
    %107 = vmatmul.mubr.bf16.gmra.mrb[0].mxu0 %v72
    %v108 = vpop.f32.mrb[0].mxu0
    %v109 = vadd.f32 %v56, %v108
    %v110 = vpop.f32.mrb[0].mxu0
    %v111 = vpop.f32.mrb[0].mxu0
    %v112 = vadd.f32 %v56, %v111
    %v113 = vpop.f32.mrb[0].mxu0
    %114 = vdwg.mxu0
    %v115 = vpack.c.bf16 %v109, %v109
    %117 = vrot.lane.b32.xlu0 %v115, 96
    %v118 = vpop.permute.xlu0 %117
    %v120 = vsel %vm70, %v115, 0
    %v123 = vsel %vm70, %v118, 0
    %125 = vmatprep.subr.bf16.mxu0 0
    %126 = vmatpush1.bf16.xpose.msra.mxu0 %v123
    %127 = vmatprep.subr.bf16.mxu0 0
    %128 = vmatpush1.bf16.xpose.msra.mxu0 0
    %129 = vmatprep.subr.bf16.mxu0 0
    %130 = vmatpush1.bf16.xpose.msra.mxu0 0
    %131 = vmatprep.subr.bf16.mxu0 0
    %132 = vmatpush1.bf16.xpose.msra.mxu0 0
    %133 = vmatprep.subr.bf16.mxu0 0
    %134 = vmatpush1.bf16.xpose.msra.mxu0 0
    %135 = vmatprep.subr.bf16.mxu0 0
    %136 = vmatpush1.bf16.xpose.msra.mxu0 0
    %137 = vmatprep.subr.bf16.mxu0 0
    %138 = vmatpush1.bf16.xpose.msra.mxu0 0
    %139 = vmatprep.subr.bf16.mxu0 0
    %140 = vmatpush1.bf16.xpose.msra.mxu0 0
    %141 = vmatprep.subr.bf16.mxu0 0
    %142 = vmatpush1.bf16.xpose.msra.mxu0 0
    %143 = vmatprep.subr.bf16.mxu0 0
    %144 = vmatpush1.bf16.xpose.msra.mxu0 0
    %145 = vmatprep.subr.bf16.mxu0 0
    %146 = vmatpush1.bf16.xpose.msra.mxu0 0
    %147 = vmatprep.subr.bf16.mxu0 0
    %148 = vmatpush1.bf16.xpose.msra.mxu0 0
    %149 = vmatprep.subr.bf16.mxu0 0
    %150 = vmatpush1.bf16.xpose.msra.mxu0 0
    %151 = vmatprep.subr.bf16.mxu0 0
    %152 = vmatpush1.bf16.xpose.msra.mxu0 0
    %153 = vmatprep.subr.bf16.mxu0 0
    %154 = vmatpush1.bf16.xpose.msra.mxu0 0
    %155 = vmatprep.subr.bf16.mxu0 0
    %156 = vmatpush1.bf16.xpose.msra.mxu0 0
    %157 = vmatprep.mubr.bf16.mxu0 0
    %158 = vmatmul.mubr.bf16.gmra.mrb[0].mxu0 %v120
    %v159 = vpop.f32.mrb[0].mxu0
    %v160 = vadd.f32 0.0, %v159
    %v161 = vpop.f32.mrb[0].mxu0
    %v162 = vpop.f32.mrb[0].mxu0
    %v163 = vpop.f32.mrb[0].mxu0
    %164 = vdwg.mxu0
    %v165 = vmul.f32 %v160, 0.17677669
    %vm166 = vcmask 64512
    %v167 = vsel %vm166, %v165, -inf
    %168 = vmax.xlane.f32.xlu0 %v167
    %v169 = vpop.xlane.xlu0 %168
    %v170 = vsub.f32 %v165, %v169
    %v171 = vmul.f32 %v170, 1.442695
    %v172 = vpow.pop %v171
    %v173 = vsel %vm166, %v172, 0.0
    %174 = vadd.xlane.f32.xlu0 %v173
    %v175 = vpop.xlane.xlu0 %174
    %v176 = vrcp.pop %v175
    %v177 = vmul.f32 %v172, %v176
    %v178 = vpack.c.bf16 %v177, %v177
    %179 = vrot.lane.b32.xlu0 %v115, 64
    %v180 = vpop.permute.xlu0 %179
    %v182 = vsel %vm166, %v178, 0
    %vm184 = vcmask 1043456
    %v186 = vsel %vm184, %v180, 0
    %188 = vmatprep.subr.bf16.mxu0 0
    %189 = vmatpush1.bf16.msra.mxu0 %v186
    %190 = vmatprep.subr.bf16.mxu0 0
    %191 = vmatpush1.bf16.msra.mxu0 0
    %192 = vmatprep.subr.bf16.mxu0 0
    %193 = vmatpush1.bf16.msra.mxu0 0
    %194 = vmatprep.subr.bf16.mxu0 0
    %195 = vmatpush1.bf16.msra.mxu0 0
    %196 = vmatprep.subr.bf16.mxu0 0
    %197 = vmatpush1.bf16.msra.mxu0 0
    %198 = vmatprep.subr.bf16.mxu0 0
    %199 = vmatpush1.bf16.msra.mxu0 0
    %200 = vmatprep.subr.bf16.mxu0 0
    %201 = vmatpush1.bf16.msra.mxu0 0
    %202 = vmatprep.subr.bf16.mxu0 0
    %203 = vmatpush1.bf16.msra.mxu0 0
    %204 = vmatprep.subr.bf16.mxu0 0
    %205 = vmatpush1.bf16.msra.mxu0 0
    %206 = vmatprep.subr.bf16.mxu0 0
    %207 = vmatpush1.bf16.msra.mxu0 0
    %208 = vmatprep.subr.bf16.mxu0 0
    %209 = vmatpush1.bf16.msra.mxu0 0
    %210 = vmatprep.subr.bf16.mxu0 0
    %211 = vmatpush1.bf16.msra.mxu0 0
    %212 = vmatprep.subr.bf16.mxu0 0
    %213 = vmatpush1.bf16.msra.mxu0 0
    %214 = vmatprep.subr.bf16.mxu0 0
    %215 = vmatpush1.bf16.msra.mxu0 0
    %216 = vmatprep.subr.bf16.mxu0 0
    %217 = vmatpush1.bf16.msra.mxu0 0
    %218 = vmatprep.subr.bf16.mxu0 0
    %219 = vmatpush1.bf16.msra.mxu0 0
    %220 = vmatprep.mubr.bf16.mxu0 0
    %221 = vmatmul.mubr.bf16.gmra.mrb[0].mxu0 %v182
    %v222 = vpop.f32.mrb[0].mxu0
    %v223 = vadd.f32 0.0, %v222
    %v224 = vpop.f32.mrb[0].mxu0
    %v225 = vpop.f32.mrb[0].mxu0
    %v226 = vpop.f32.mrb[0].mxu0
    %227 = vdwg.mxu0
    %228 = vst.msk [vmem:[#allocation7] sm:$0xff] %vm70, %v223
    %v229 = vpack.c.bf16 %v112, %v112
    %231 = vrot.lane.b32.xlu0 %v229, 96
    %v232 = vpop.permute.xlu0 %231
    %v234 = vsel %vm70, %v229, 0
    %v237 = vsel %vm70, %v232, 0
    %239 = vmatprep.subr.bf16.mxu0 0
    %240 = vmatpush1.bf16.xpose.msra.mxu0 %v237
    %241 = vmatprep.subr.bf16.mxu0 0
    %242 = vmatpush1.bf16.xpose.msra.mxu0 0
    %243 = vmatprep.subr.bf16.mxu0 0
    %244 = vmatpush1.bf16.xpose.msra.mxu0 0
    %245 = vmatprep.subr.bf16.mxu0 0
    %246 = vmatpush1.bf16.xpose.msra.mxu0 0
    %247 = vmatprep.subr.bf16.mxu0 0
    %248 = vmatpush1.bf16.xpose.msra.mxu0 0
    %249 = vmatprep.subr.bf16.mxu0 0
    %250 = vmatpush1.bf16.xpose.msra.mxu0 0
    %251 = vmatprep.subr.bf16.mxu0 0
    %252 = vmatpush1.bf16.xpose.msra.mxu0 0
    %253 = vmatprep.subr.bf16.mxu0 0
    %254 = vmatpush1.bf16.xpose.msra.mxu0 0
    %255 = vmatprep.subr.bf16.mxu0 0
    %256 = vmatpush1.bf16.xpose.msra.mxu0 0
    %257 = vmatprep.subr.bf16.mxu0 0
    %258 = vmatpush1.bf16.xpose.msra.mxu0 0
    %259 = vmatprep.subr.bf16.mxu0 0
    %260 = vmatpush1.bf16.xpose.msra.mxu0 0
    %261 = vmatprep.subr.bf16.mxu0 0
    %262 = vmatpush1.bf16.xpose.msra.mxu0 0
    %263 = vmatprep.subr.bf16.mxu0 0
    %264 = vmatpush1.bf16.xpose.msra.mxu0 0
    %265 = vmatprep.subr.bf16.mxu0 0
    %266 = vmatpush1.bf16.xpose.msra.mxu0 0
    %267 = vmatprep.subr.bf16.mxu0 0
    %268 = vmatpush1.bf16.xpose.msra.mxu0 0
    %269 = vmatprep.subr.bf16.mxu0 0
    %270 = vmatpush1.bf16.xpose.msra.mxu0 0
    %271 = vmatprep.mubr.bf16.mxu0 0
    %272 = vmatmul.mubr.bf16.gmra.mrb[0].mxu0 %v234
    %v273 = vpop.f32.mrb[0].mxu0
    %v274 = vadd.f32 0.0, %v273
    %v275 = vpop.f32.mrb[0].mxu0
    %v276 = vpop.f32.mrb[0].mxu0
    %v277 = vpop.f32.mrb[0].mxu0
    %278 = vdwg.mxu0
    %v279 = vmul.f32 %v274, 0.17677669
    %v280 = vsel %vm166, %v279, -inf
    %281 = vmax.xlane.f32.xlu0 %v280
    %v282 = vpop.xlane.xlu0 %281
    %v283 = vsub.f32 %v279, %v282
    %v284 = vmul.f32 %v283, 1.442695
    %v285 = vpow.pop %v284
    %v286 = vsel %vm166, %v285, 0.0
    %287 = vadd.xlane.f32.xlu0 %v286
    %v288 = vpop.xlane.xlu0 %287
    %v289 = vrcp.pop %v288
    %v290 = vmul.f32 %v285, %v289
    %v291 = vpack.c.bf16 %v290, %v290
    %292 = vrot.lane.b32.xlu0 %v229, 64
    %v293 = vpop.permute.xlu0 %292
    %v295 = vsel %vm166, %v291, 0
    %v298 = vsel %vm184, %v293, 0
    %300 = vmatprep.subr.bf16.mxu0 0
    %301 = vmatpush1.bf16.msra.mxu0 %v298
    %302 = vmatprep.subr.bf16.mxu0 0
    %303 = vmatpush1.bf16.msra.mxu0 0
    %304 = vmatprep.subr.bf16.mxu0 0
    %305 = vmatpush1.bf16.msra.mxu0 0
    %306 = vmatprep.subr.bf16.mxu0 0
    %307 = vmatpush1.bf16.msra.mxu0 0
    %308 = vmatprep.subr.bf16.mxu0 0
    %309 = vmatpush1.bf16.msra.mxu0 0
    %310 = vmatprep.subr.bf16.mxu0 0
    %311 = vmatpush1.bf16.msra.mxu0 0
    %312 = vmatprep.subr.bf16.mxu0 0
    %313 = vmatpush1.bf16.msra.mxu0 0
    %314 = vmatprep.subr.bf16.mxu0 0
    %315 = vmatpush1.bf16.msra.mxu0 0
    %316 = vmatprep.subr.bf16.mxu0 0
    %317 = vmatpush1.bf16.msra.mxu0 0
    %318 = vmatprep.subr.bf16.mxu0 0
    %319 = vmatpush1.bf16.msra.mxu0 0
    %320 = vmatprep.subr.bf16.mxu0 0
    %321 = vmatpush1.bf16.msra.mxu0 0
    %322 = vmatprep.subr.bf16.mxu0 0
    %323 = vmatpush1.bf16.msra.mxu0 0
    %324 = vmatprep.subr.bf16.mxu0 0
    %325 = vmatpush1.bf16.msra.mxu0 0
    %326 = vmatprep.subr.bf16.mxu0 0
    %327 = vmatpush1.bf16.msra.mxu0 0
    %328 = vmatprep.subr.bf16.mxu0 0
    %329 = vmatpush1.bf16.msra.mxu0 0
    %330 = vmatprep.subr.bf16.mxu0 0
    %331 = vmatpush1.bf16.msra.mxu0 0
    %332 = vmatprep.mubr.bf16.mxu0 0
    %333 = vmatmul.mubr.bf16.gmra.mrb[0].mxu0 %v295
    %v334 = vpop.f32.mrb[0].mxu0
    %v335 = vadd.f32 0.0, %v334
    %v336 = vpop.f32.mrb[0].mxu0
    %v337 = vpop.f32.mrb[0].mxu0
    %v338 = vpop.f32.mrb[0].mxu0
    %339 = vdwg.mxu0
    %340 = vst.msk [vmem:[#allocation7 + $0x8] sm:$0xff] %vm70, %v335
    // Predicated region
    $region22: #{tpu_custom_call.1} parent=1 // pred_check
      _
    $region23: #{tpu_custom_call.1} parent=1 // pred_check_branch
      %342 = sbr.rel (0) target = $region25
    $region24: #{tpu_custom_call.1} parent=1 // pred_region
      %s344 = ssub.s32 256, 256
      %345 = vsyncadd [#allocation4], %s344
      %s346 = sshll.u32 [#allocation7], 4
      %s347 = int_to_ptr.vmem [resolvable:$true] %s346
      %352 = dma.vmem_to_hbm [thread:$0]  %s347, 256, %s3, [#allocation4], 128, 128, 8
    $region25: #{tpu_custom_call.1} parent=1 // pred_fallthru
      _
    // Predicated region
    $region26: #{tpu_custom_call.1} parent=1 // pred_check
      _
    $region27: #{tpu_custom_call.1} parent=1 // pred_check_branch
      %354 = sbr.rel (0) target = $region29
    $region28: #{tpu_custom_call.1} parent=1 // pred_region
      %355 = dma.done [#allocation4], 256
    $region29: #{tpu_custom_call.1} parent=1 // pred_fallthru
      _
    %356 = vsyncpa [#allocation3], 1
    %357 = vsyncpa [#allocation6], 1
    %358 = vsyncpa [#allocation4], 1

</llo_original>
